<compile_context>
chip_gen: v5e
topology: v5e:2x2
jax: 0.10.0
libtpu: 0.0.40
codegen_flags: <defaults>
</compile_context>

<pallas_src>
import math

import jax
import jax.numpy as jnp
from jax.experimental import pallas as pl
from jax.experimental.pallas import tpu as pltpu


# ---------------------------------------------------------------------------
# Zero-copy (aliased) path: flatten needs no data movement at all.
# ---------------------------------------------------------------------------
def _alias_noop_kernel(x_hbm_ref, o_hbm_ref, flag_ref):
    # The output buffer aliases the input buffer (input_output_aliases={0:0}),
    # so the flattened bytes are already in place.  No DMA, no compute.
    # Write one SMEM scalar so the kernel body is a trivially lowerable op
    # that never touches the HBM refs.
    flag_ref[0] = jnp.int32(1)


def _flatten_zero_copy(x2: jax.Array) -> jax.Array:
    n, flat = x2.shape
    return pl.pallas_call(
        _alias_noop_kernel,
        out_shape=jax.ShapeDtypeStruct((n, flat), x2.dtype),
        in_specs=[pl.BlockSpec(memory_space=pl.ANY)],   # raw HBM ref, no auto-DMA
        out_specs=pl.BlockSpec(memory_space=pl.ANY),
        scratch_shapes=[pltpu.SMEM((1,), jnp.int32)],
        input_output_aliases={0: 0},                    # output reuses input bytes
        compiler_params=pltpu.CompilerParams(has_side_effects=True),
    )(x2)


# ---------------------------------------------------------------------------
# Streaming-copy path: lane-dense tiled HBM->HBM copy at the BW roofline.
# ---------------------------------------------------------------------------
def _copy_kernel(x_ref, o_ref):
    # Pure lane-dense vld -> vst copy of one (tn, tf) tile.
    o_ref[...] = x_ref[...]


def _choose_tiles(n: int, flat: int, dtype) -> tuple[int, int]:
    """Fixed (tn, tf) tiles for a cdiv grid (ragged edges are masked)."""
    itemsize = jnp.dtype(dtype).itemsize
    # dtype-aware sublane multiple: f32 -> 8, bf16/f16 -> 16, int8/fp8 -> 32.
    sub = max(8, 32 // itemsize)
    # ~4 MiB blocks: double-buffered in + out = 4x block = 16 MiB, safely under
    # the 32 MiB scoped-VMEM budget valid on every generation (v7x: 64 MiB VMEM).
    max_block_bytes = 4 * 1024 * 1024

    # Lane tile: a multiple of 128 (unmasked vst) or the full extent.
    if flat % 128 == 0:
        tf = min(flat, 2048)
    elif flat < 1024:
        tf = flat            # full extent: legal per the (8,128) rule
    else:
        tf = 1024            # multiple of 128; cdiv grid masks the ragged edge

    # Sublane tile: a multiple of `sub` or the full extent, under the budget.
    rows_cap = max(sub, max_block_bytes // (tf * itemsize))
    if n <= rows_cap:
        tn = n               # full extent: legal per the (8,128) rule
    else:
        tn = (rows_cap // sub) * sub
    return tn, tf


def _flatten_copy(x2: jax.Array) -> jax.Array:
    n, flat = x2.shape
    itemsize = jnp.dtype(x2.dtype).itemsize
    tn, tf = _choose_tiles(n, flat, x2.dtype)
    grid = (pl.cdiv(n, tn), pl.cdiv(flat, tf))

    return pl.pallas_call(
        _copy_kernel,
        out_shape=jax.ShapeDtypeStruct((n, flat), x2.dtype),
        grid_spec=pltpu.PrefetchScalarGridSpec(
            num_scalar_prefetch=0,
            grid=grid,
            in_specs=[pl.BlockSpec((tn, tf), lambda i, j: (i, j))],
            out_specs=pl.BlockSpec((tn, tf), lambda i, j: (i, j)),
        ),
        compiler_params=pltpu.CompilerParams(
            # Independent blocks: shardable across v7x's 2 TensorCores.
            dimension_semantics=("parallel", "parallel"),
            # v7x-safe budget (<= its 32 MiB scoped default); 4x block = 16 MiB.
            vmem_limit_bytes=32 * 1024 * 1024,
        ),
        # Purely bandwidth-bound: help XLA schedule/overlap surrounding ops.
        cost_estimate=pl.CostEstimate(
            flops=0, transcendentals=0,
            bytes_accessed=2 * n * flat * itemsize),
    )(x2)


# ---------------------------------------------------------------------------
# Public wrapper: Pallas equivalent of FlattenLayer.forward.
# ---------------------------------------------------------------------------
def flatten_layer(x: jax.Array, zero_copy: bool = True) -> jax.Array:
    """(N, ...) -> (N, prod(...)); equivalent to X.view(X.shape[0], -1)."""
    n = x.shape[0]
    flat = math.prod(x.shape[1:]) if x.ndim > 1 else 1

    # Free metadata reshape (same as torch .view on a contiguous tensor):
    # gives a lane-dense (N, flat) layout with no in-kernel reshape/relayout.
    x2 = x.reshape(n, flat)

    if zero_copy or flat < 128:
        # flat < 128 (incl. 1-D inputs) would be lane-sparse masked stores in
        # the copy kernel; alias instead -- zero data movement either way.
        return _flatten_zero_copy(x2)
    return _flatten_copy(x2)


if __name__ == "__main__":
    key = jax.random.PRNGKey(0)
    k1, k2, k3 = jax.random.split(key, 3)

    # Primary case: small NCHW conv feature map (batch=2, C=4, H=W=16).
    x = jax.random.normal(k1, (2, 4, 16, 16), dtype=jnp.float32)
    ref = x.reshape(x.shape[0], -1)

    # 1) Default zero-copy (aliased) path.
    out = jax.block_until_ready(flatten_layer(x))
    assert out.shape == (2, 4 * 16 * 16), out.shape
    assert out.dtype == x.dtype
    assert jnp.array_equal(out, ref), "zero-copy flatten mismatch"

    # 2) Streaming-copy path (exercises the tiled copy kernel).
    out2 = jax.block_until_ready(flatten_layer(x, zero_copy=False))
    assert jnp.array_equal(out2, ref), "copy flatten mismatch"

    # 3) Unaligned flat dim -> cdiv grid with a masked ragged-edge block.
    y = jax.random.normal(k2, (8, 4, 20, 20), dtype=jnp.float32)   # flat = 1600
    outy = jax.block_until_ready(flatten_layer(y, zero_copy=False))
    assert jnp.array_equal(outy, y.reshape(8, -1)), "unaligned flatten mismatch"

    # 4) bf16 (dtype-aware sublane multiple) through the copy kernel.
    z = jax.random.normal(k3, (4, 8, 32), dtype=jnp.bfloat16)      # flat = 256
    outz = jax.block_until_ready(flatten_layer(z, zero_copy=False))
    assert jnp.array_equal(outz, z.reshape(4, -1)), "bf16 flatten mismatch"

    # 5) 1-D input: view(N, -1) -> (N, 1); routed to the zero-copy path.
    v = jnp.arange(8, dtype=jnp.float32)
    outv = jax.block_until_ready(flatten_layer(v))
    assert outv.shape == (8, 1) and jnp.array_equal(outv, v.reshape(8, -1))

    print("KERNEL_OK")
</pallas_src>

<mosaic_0001>
module attributes {stable_mosaic.version = 11 : i64} {
  func.func @_alias_noop_kernel(%arg0: memref<2x1024xf32, #tpu.memory_space<any>>, %arg1: memref<2x1024xf32, #tpu.memory_space<any>>, %arg2: memref<1xi32, #tpu.memory_space<smem>>) attributes {dimension_semantics = [], scalar_prefetch = 0 : i64, scratch_operands = 1 : i64, tpu.core_type = #tpu.core_type<tc>} {
    %c1_i32 = arith.constant 1 : i32
    %c0 = arith.constant 0 : index
    %0 = memref.load %arg2[%c0] : memref<1xi32, #tpu.memory_space<smem>>
    memref.store %c1_i32, %arg2[%c0] : memref<1xi32, #tpu.memory_space<smem>>
    return
  }
}

</mosaic_0001>

<llo_original>
// kernel: tpu_custom_call.1
$region0: #{tpu_custom_call.1}
  #allocation0 [shape = 'u32[]', space=smem, size = 0x4, offset = 0x4, fixed_abs, tag = 'smem constant byte address 0x4 - core index']
  #allocation1 [shape = 'u32[72,128]{1,0:T(1,128)}', space=vmem, size = 0x9000, scoped, tag = 'internal scratch']
  #allocation2 [shape = 's32[1]{0:T(128)}', space=smem, size = 0x200, scoped, tag = 'scratch operand']
  %s0 = inlined_call_operand.hbm [shape: f32[2,1024], index: 0, kind: input, shape index: {}, may-alias: {0,1}]
  %s1 = inlined_call_operand.hbm [shape: f32[2,1024], index: 1, kind: output, shape index: {}, may-alias: {0,1}]
  %s2 = sld [smem:[#allocation0]]
  $region2: #{tpu_custom_call.1} parent=0
    _
  %s4 = ssub.s32 1, %s2
  %s5 = scalar_select 0, %s4, %s2
  %s6 = scalar_lea.smem [#allocation2], 0
  %7 = sst [smem:[%s6]] 1

</llo_original>
